<compile_context>
chip_gen: v6e
topology: v6e:2x2x1
jax: 0.10.0
libtpu: 0.0.40
codegen_flags: <defaults>
</compile_context>

<pallas_src>
import math

import jax
import jax.numpy as jnp
from jax.experimental import pallas as pl
from jax.experimental.pallas import tpu as pltpu

_LANE = 128


def _round_up(x, m):
    return ((x + m - 1) // m) * m


def _cdiv(a, b):
    return -(-a // b)


_VMEM_CAP_CACHE = None


def _vmem_capacity_bytes():
    """Physical VMEM per TensorCore (64 MiB on v7x, 128 MiB on v5e/v6e)."""
    global _VMEM_CAP_CACHE
    if _VMEM_CAP_CACHE is None:
        try:
            _VMEM_CAP_CACHE = int(pltpu.get_tpu_info().vmem_capacity_bytes)
        except Exception:
            _VMEM_CAP_CACHE = 64 * 1024 * 1024   # conservative (v7x-sized) fallback
    return _VMEM_CAP_CACHE


# ---------------------------------------------------------------------------
# Pallas kernels
# ---------------------------------------------------------------------------
def _gemm_bias_kernel(x_ref, w_ref, b_ref, o_ref):
    """Single-K-block tile:  o = x @ w + b  (f32 MXU accumulation)."""
    acc = jnp.dot(x_ref[...], w_ref[...], preferred_element_type=jnp.float32)
    o_ref[...] = (acc + b_ref[...]).astype(o_ref.dtype)


def _gemm_bias_acc_kernel(x_ref, w_ref, b_ref, o_ref, acc_ref):
    """K-tiled tile: accumulate partial products; add bias & store on last K step."""
    k = pl.program_id(2)

    @pl.when(k == 0)
    def _():
        acc_ref[...] = jnp.zeros_like(acc_ref)

    acc_ref[...] += jnp.dot(x_ref[...], w_ref[...],
                            preferred_element_type=jnp.float32)

    @pl.when(k == pl.num_programs(2) - 1)
    def _():
        o_ref[...] = (acc_ref[...] + b_ref[...]).astype(o_ref.dtype)


# ---------------------------------------------------------------------------
# Tile selection
# ---------------------------------------------------------------------------
def _select_tiles(M, D, K, in_itemsize, out_itemsize, budget):
    # Column tile: keep the full (small) D when possible so the output is
    # written exactly (M, D) -- no lane padding, no post-slice.
    tile_n = D if D <= 256 else 256

    # Row tile: largest of {512, 256, 128} that still yields >= 2 row tiles
    # when M > 128 (so v7x megacore has work for both TensorCores).
    if M <= 128:
        tile_m = 128
    else:
        tile_m = 128
        for tm in (512, 256):
            if _cdiv(M, tm) >= 2:
                tile_m = tm
                break

    def ws_bytes(tm, tn, tk):
        # double-buffered inputs + output, bias row, f32 accumulator scratch
        return (2 * (tm * tk + tk * tn) * in_itemsize
                + 2 * tn * 4
                + 2 * tm * tn * out_itemsize
                + tm * tn * 4)

    # K tile: start untiled (128-aligned); halve to 256-multiples while the
    # working set exceeds the budget, then shrink tile_m (128-multiples only).
    tile_k = _round_up(K, _LANE)
    while ws_bytes(tile_m, tile_n, tile_k) > budget and tile_k > 256:
        tile_k = max(256, _round_up(tile_k // 2, 256))
    while ws_bytes(tile_m, tile_n, tile_k) > budget and tile_m > 128:
        tile_m //= 2
    # Minimum config (128, <=256, 256) is well under 1 MiB, so it always fits.
    return tile_m, tile_n, tile_k


# ---------------------------------------------------------------------------
# GEMM + bias:  patches (M,K) @ w_flat (K,D) + bias  ->  (M,D) f32
# ---------------------------------------------------------------------------
def _patch_emb_matmul(patches, w_flat, bias_row):
    M, K = patches.shape
    Kw, D = w_flat.shape
    assert K == Kw and bias_row.shape == (1, D)

    in_itemsize = patches.dtype.itemsize
    out_itemsize = 4

    cap = _vmem_capacity_bytes()
    budget = (cap * 3) // 8                                   # working-set target
    vmem_limit = max(min((cap * 3) // 4, cap - (16 << 20)), budget + (8 << 20))

    tile_m, tile_n, tile_k = _select_tiles(M, D, K, in_itemsize, out_itemsize, budget)

    # Zero-pad K to a multiple of tile_k: lane-aligned loads for the dominant
    # (patches) operand, and -- when K is tiled -- no out-of-bounds garbage can
    # leak into the accumulation.  M / D padding is NOT needed: partial edge
    # blocks only produce rows/cols that are masked on writeback.
    k_pad = _round_up(K, tile_k)
    if k_pad != K:
        patches = jnp.pad(patches, ((0, 0), (0, k_pad - K)))
        w_flat = jnp.pad(w_flat, ((0, k_pad - K), (0, 0)))

    grid_m = _cdiv(M, tile_m)
    grid_n = _cdiv(D, tile_n)
    grid_k = k_pad // tile_k

    cost = pl.CostEstimate(
        flops=2 * M * K * D,
        transcendentals=0,
        bytes_accessed=(M * k_pad * in_itemsize        # patches actually read
                        + k_pad * D * in_itemsize      # weight
                        + D * 4                        # bias
                        + M * D * out_itemsize),       # output
    )

    if grid_k == 1:
        grid = (grid_m, grid_n)
        in_specs = [
            pl.BlockSpec((tile_m, k_pad), lambda i, j: (i, 0)),   # patch row tile
            pl.BlockSpec((k_pad, tile_n), lambda i, j: (0, j)),   # weight (resident if grid_n==1)
            pl.BlockSpec((1, tile_n), lambda i, j: (0, j)),       # bias
        ]
        out_specs = pl.BlockSpec((tile_m, tile_n), lambda i, j: (i, j))
        kernel = _gemm_bias_kernel
        scratch_shapes = ()
        dim_sem = ("parallel", "parallel")
    else:
        grid = (grid_m, grid_n, grid_k)                           # reduction axis last
        in_specs = [
            pl.BlockSpec((tile_m, tile_k), lambda i, j, k: (i, k)),
            pl.BlockSpec((tile_k, tile_n), lambda i, j, k: (k, j)),
            pl.BlockSpec((1, tile_n), lambda i, j, k: (0, j)),
        ]
        out_specs = pl.BlockSpec((tile_m, tile_n), lambda i, j, k: (i, j))
        kernel = _gemm_bias_acc_kernel
        scratch_shapes = [pltpu.VMEM((tile_m, tile_n), jnp.float32)]
        dim_sem = ("parallel", "parallel", "arbitrary")

    out = pl.pallas_call(
        kernel,
        out_shape=jax.ShapeDtypeStruct((M, D), jnp.float32),
        grid_spec=pltpu.PrefetchScalarGridSpec(
            num_scalar_prefetch=0,
            grid=grid,
            in_specs=in_specs,
            out_specs=out_specs,
            scratch_shapes=scratch_shapes,
        ),
        compiler_params=pltpu.CompilerParams(
            dimension_semantics=dim_sem,
            vmem_limit_bytes=vmem_limit,
        ),
        cost_estimate=cost,
    )(patches, w_flat, bias_row)

    return out


# ---------------------------------------------------------------------------
# Module-equivalent wrapper
# ---------------------------------------------------------------------------
class SpatialPatchEmb:
    """JAX/Pallas equivalent of the PyTorch SpatialPatchEmb module.

    NOTE: the PyTorch forward's reshape(B, C, H*W // p**2) only type-checks
    when d_model == c_in; we keep that constraint and return (B, N, d_model).
    """

    def __init__(self, c_in, d_model, patch_size, key, compute_dtype=jnp.bfloat16):
        assert d_model == c_in, "PyTorch forward's reshape requires d_model == c_in"
        self.c_in = c_in
        self.d_model = d_model
        self.patch_size = patch_size
        # Use compute_dtype=jnp.float32 as an opt-out for parity-sensitive callers.
        self.compute_dtype = compute_dtype

        k_w, k_b = jax.random.split(key)
        fan_in = c_in * patch_size * patch_size
        # kaiming_normal_(mode='fan_in', nonlinearity='leaky_relu', a=0):
        #   gain = sqrt(2); std = gain / sqrt(fan_in)
        std = math.sqrt(2.0) / math.sqrt(fan_in)
        self.weight = std * jax.random.normal(
            k_w, (d_model, c_in, patch_size, patch_size), dtype=jnp.float32)
        # Conv2d default bias init: U(-1/sqrt(fan_in), 1/sqrt(fan_in))
        bound = 1.0 / math.sqrt(fan_in)
        self.bias = jax.random.uniform(
            k_b, (d_model,), minval=-bound, maxval=bound, dtype=jnp.float32)

    def __call__(self, x):
        # x: (B, C, H, W), NCHW like PyTorch.
        B, C, H, W = x.shape
        p = self.patch_size
        Hp, Wp = H // p, W // p
        N = Hp * Wp
        K = C * p * p
        D = self.d_model

        # Patch extraction (stride == kernel == p): one fused XLA pass that
        # reads x (f32) once and writes bf16 patches once; the bf16 cast (and
        # any K zero-pad inside _patch_emb_matmul) fuse into this transpose.
        # Row order (b, hp, wp); column order (c, i, j) matches the conv
        # weight flattening below.
        patches = x.reshape(B, C, Hp, p, Wp, p)
        patches = jnp.transpose(patches, (0, 2, 4, 1, 3, 5))
        patches = patches.reshape(B * N, K).astype(self.compute_dtype)

        w_flat = self.weight.reshape(D, K).T.astype(self.compute_dtype)   # (K, D)
        bias_row = self.bias.reshape(1, D).astype(jnp.float32)

        out = _patch_emb_matmul(patches, w_flat, bias_row)                # (M, D) f32
        # matches x.reshape(B, C, H*W//p**2).permute(0, 2, 1) -> (B, N, D)
        return out.reshape(B, N, D)


# ---------------------------------------------------------------------------
# Pure-JAX reference (f32 lax conv) for correctness checking
# ---------------------------------------------------------------------------
def _reference_forward(x, weight, bias, patch_size):
    B, C, H, W = x.shape
    p = patch_size
    y = jax.lax.conv_general_dilated(
        x, weight, window_strides=(p, p), padding="VALID",
        dimension_numbers=("NCHW", "OIHW", "NCHW"),
        precision=jax.lax.Precision.HIGHEST,
    ) + bias.reshape(1, -1, 1, 1)
    D = weight.shape[0]
    N = (H // p) * (W // p)
    return jnp.transpose(y.reshape(B, D, N), (0, 2, 1))


if __name__ == "__main__":
    key = jax.random.PRNGKey(0)
    k_param, k_x = jax.random.split(key)

    # Small, module-consistent shapes (d_model == c_in forced by the forward).
    # M = B*N = 4*64 = 256 rows -> two 128-row tiles (both v7x cores get work);
    # K = C*p^2 = 512 (already lane-aligned, untiled); D = 32 written un-padded.
    B, C_IN, D_MODEL, H, W, PATCH = 4, 32, 32, 32, 32, 4

    mod = SpatialPatchEmb(C_IN, D_MODEL, PATCH, k_param)
    x = jax.random.normal(k_x, (B, C_IN, H, W), dtype=jnp.float32)

    fwd = jax.jit(mod.__call__)
    out = jax.block_until_ready(fwd(x))

    ref = _reference_forward(x, mod.weight, mod.bias, PATCH)
    N = (H // PATCH) * (W // PATCH)
    assert out.shape == (B, N, D_MODEL), out.shape
    # bf16 matmul inputs with f32 accumulation -> looser tolerance vs f32 ref.
    assert jnp.allclose(out, ref, atol=5e-2, rtol=5e-2), "mismatch vs reference"

    print("KERNEL_OK")
</pallas_src>

<mosaic_0001>
module attributes {stable_mosaic.version = 11 : i64} {
  func.func @_gemm_bias_kernel(%arg0: i32, %arg1: i32, %arg2: memref<128x512xbf16, #tpu.memory_space<vmem>>, %arg3: memref<512x32xbf16, #tpu.memory_space<vmem>>, %arg4: memref<1x32xf32, #tpu.memory_space<vmem>>, %arg5: memref<128x32xf32, #tpu.memory_space<vmem>>) attributes {dimension_semantics = [#tpu.dimension_semantics<parallel>, #tpu.dimension_semantics<parallel>], iteration_bounds = array<i64: 2, 1>, scalar_prefetch = 0 : i64, scratch_operands = 0 : i64, tpu.core_type = #tpu.core_type<tc>, window_params = [{transform_indices = @transform_0, window_bounds = array<i64: 128, 512>}, {transform_indices = @transform_1, window_bounds = array<i64: 512, 32>}, {transform_indices = @transform_2, window_bounds = array<i64: 1, 32>}, {transform_indices = @transform_3, window_bounds = array<i64: 128, 32>}]} {
    %c0 = arith.constant 0 : index
    %c0_0 = arith.constant 0 : index
    %0 = vector.load %arg2[%c0, %c0_0] : memref<128x512xbf16, #tpu.memory_space<vmem>>, vector<128x512xbf16>
    %c0_1 = arith.constant 0 : index
    %c0_2 = arith.constant 0 : index
    %1 = vector.load %arg3[%c0_1, %c0_2] : memref<512x32xbf16, #tpu.memory_space<vmem>>, vector<512x32xbf16>
    %cst = arith.constant dense<0.000000e+00> : vector<128x32xf32>
    %2 = tpu.matmul %0, %1, %cst {dimension_numbers = #tpu.dot_dimension_numbers<[1], [0], [0], [1], [0, 0, 1, 1], [], []>} : vector<128x512xbf16>, vector<512x32xbf16>, vector<128x32xf32> -> vector<128x32xf32>
    %c0_3 = arith.constant 0 : index
    %c0_4 = arith.constant 0 : index
    %3 = vector.load %arg4[%c0_3, %c0_4] : memref<1x32xf32, #tpu.memory_space<vmem>>, vector<1x32xf32>
    %4 = vector.broadcast %3 : vector<1x32xf32> to vector<128x32xf32>
    %5 = arith.addf %2, %4 : vector<128x32xf32>
    %c0_5 = arith.constant 0 : index
    %c0_6 = arith.constant 0 : index
    %6 = vector.load %arg5[%c0_5, %c0_6] : memref<128x32xf32, #tpu.memory_space<vmem>>, vector<128x32xf32>
    tpu.vector_store %arg5[%c0_5, %c0_6], %5 {strides = array<i32>} : memref<128x32xf32, #tpu.memory_space<vmem>>, vector<128x32xf32>,
    return
  }
  func.func @transform_0(%arg0: i32, %arg1: i32) -> (i32, i32) {
    %c0_i32 = arith.constant 0 : i32
    %c0_i32_0 = arith.constant 0 : i32
    return %arg0, %c0_i32 : i32, i32
  }
  func.func @transform_1(%arg0: i32, %arg1: i32) -> (i32, i32) {
    %c0_i32 = arith.constant 0 : i32
    %c0_i32_0 = arith.constant 0 : i32
    return %c0_i32, %arg1 : i32, i32
  }
  func.func @transform_2(%arg0: i32, %arg1: i32) -> (i32, i32) {
    %c0_i32 = arith.constant 0 : i32
    %c0_i32_0 = arith.constant 0 : i32
    return %c0_i32, %arg1 : i32, i32
  }
  func.func @transform_3(%arg0: i32, %arg1: i32) -> (i32, i32) {
    %c0_i32 = arith.constant 0 : i32
    return %arg0, %arg1 : i32, i32
  }
}

</mosaic_0001>

<llo_original>
// kernel: a_call__.1
$region0: #{a_call__.1}
  #allocation0 [shape = 'u32[]', space=smem, size = 0x4, offset = 0x4, fixed_abs, tag = 'smem constant byte address 0x4 - core index']
  #allocation1 [shape = 'u32[144,128]{1,0:T(1,128)}', space=vmem, size = 0x12000, scoped, tag = 'internal scratch']
  %s0 = inlined_call_operand.vmem [shape: bf16[256,512], index: 0, kind: input, shape index: {}]
  %s1 = inlined_call_operand.vmem [shape: bf16[512,32], index: 1, kind: input, shape index: {}]
  %s2 = inlined_call_operand.vmem [shape: f32[1,32], index: 2, kind: input, shape index: {}]
  %s3 = inlined_call_operand.vmem [shape: f32[256,32], index: 3, kind: output, shape index: {}]
  %s4 = sld [smem:[#allocation0]]
  $region45: #{a_call__.1} parent=0
    _
  %s6 = ssub.s32 1, %s4
  %s7 = scalar_select 0, %s6, %s4
  loop: start=0, step=1, limit=4
  $region2: #{a_call__.1} parent=0 // loop_pre_header
    _
  $region3: #{a_call__.1} parent=0 // loop_header
    %s9 = sphi 0, %s13
    %p10 = scmp.ge.s32.totalorder %s9, 4
    %s16 = sphi 0, %s28
    %s17 = sphi 0, %s24
    %s18 = sphi 0, %s16
    %s19 = sphi 0, %s17
    %s20 = sphi 0, %s18
    %s21 = sphi 0, %s19
    %s31 = sphi 0, %s33
    %s34 = sphi 0, %s31
    %s35 = sphi 0, %s34
    %s51 = sphi 0, %s35
    %s57 = sphi 0, %s59
    %s60 = sphi 0, %s57
    %s61 = sphi 0, %s60
    %s77 = sphi 0, %s61
    %s83 = sphi 0, %s85
    %s86 = sphi 0, %s83
    %s87 = sphi 0, %s86
    %s103 = sphi 0, %s87
    %s111 = sphi 0, %s113
    %s114 = sphi 0, %s111
    %s115 = sphi 0, %s114
    %s131 = sphi 0, %s115
  $region4: #{a_call__.1} parent=0 // loop_header_branch
    %12 = sbr.rel (%p10) target = $region8
  $region5: #{a_call__.1} parent=0 // loop_body
    %s14 = ssub.s32 %s9, 1
    %s15 = ssub.s32 %s9, 2
    %s22 = sadd.s32 1, %s17
    %p23 = scmp.ge.s32.totalorder %s22, 1
    %s24 = scalar_select %p23, 0, %s22
    %s25 = sadd.s32 1, %s16
    %s26 = scalar_select %p23, %s25, %s16
    %p27 = scmp.ge.s32.totalorder %s26, 2
    %s28 = scalar_select %p27, 0, %s26
    %s29 = ssub.s32 %s16, %s28
    %p30 = scmp.eq.s32.totalorder %s29, 0
    %s32 = sadd.s32 %s31, 1
    %s33 = scalar_select %p30, %s31, %s32
    %p36 = pneg %p30
    %p37 = scmp.eq.s32.totalorder %s9, 1
    %p38 = por %p36, %p37
    %p39 = scmp.ne.s32.totalorder %s31, %s34
    %p40 = scmp.eq.s32.totalorder %s9, 0
    %p41 = por %p39, %p40
    %p42 = scmp.ne.s32.totalorder %s31, %s34
    %p43 = scmp.eq.s32.totalorder %s14, 1
    %p44 = por %p42, %p43
    %p45 = scmp.ne.s32.totalorder %s34, %s35
    %p46 = scmp.eq.s32.totalorder %s14, 0
    %p47 = por %p45, %p46
    %p48 = scmp.ne.s32.totalorder %s34, %s35
    %p49 = scmp.eq.s32.totalorder %s15, 1
    %p50 = por %p48, %p49
    %p52 = scmp.ne.s32.totalorder %s35, %s51
    %p53 = scmp.eq.s32.totalorder %s15, 0
    %p54 = por %p52, %p53
    %s55 = ssub.s32 %s17, %s24
    %p56 = scmp.eq.s32.totalorder %s55, 0
    %s58 = sadd.s32 %s57, 1
    %s59 = scalar_select %p56, %s57, %s58
    %p62 = pneg %p56
    %p63 = scmp.eq.s32.totalorder %s9, 1
    %p64 = por %p62, %p63
    %p65 = scmp.ne.s32.totalorder %s57, %s60
    %p66 = scmp.eq.s32.totalorder %s9, 0
    %p67 = por %p65, %p66
    %p68 = scmp.ne.s32.totalorder %s57, %s60
    %p69 = scmp.eq.s32.totalorder %s14, 1
    %p70 = por %p68, %p69
    %p71 = scmp.ne.s32.totalorder %s60, %s61
    %p72 = scmp.eq.s32.totalorder %s14, 0
    %p73 = por %p71, %p72
    %p74 = scmp.ne.s32.totalorder %s60, %s61
    %p75 = scmp.eq.s32.totalorder %s15, 1
    %p76 = por %p74, %p75
    %p78 = scmp.ne.s32.totalorder %s61, %s77
    %p79 = scmp.eq.s32.totalorder %s15, 0
    %p80 = por %p78, %p79
    %s81 = ssub.s32 %s17, %s24
    %p82 = scmp.eq.s32.totalorder %s81, 0
    %s84 = sadd.s32 %s83, 1
    %s85 = scalar_select %p82, %s83, %s84
    %p88 = pneg %p82
    %p89 = scmp.eq.s32.totalorder %s9, 1
    %p90 = por %p88, %p89
    %p91 = scmp.ne.s32.totalorder %s83, %s86
    %p92 = scmp.eq.s32.totalorder %s9, 0
    %p93 = por %p91, %p92
    %p94 = scmp.ne.s32.totalorder %s83, %s86
    %p95 = scmp.eq.s32.totalorder %s14, 1
    %p96 = por %p94, %p95
    %p97 = scmp.ne.s32.totalorder %s86, %s87
    %p98 = scmp.eq.s32.totalorder %s14, 0
    %p99 = por %p97, %p98
    %p100 = scmp.ne.s32.totalorder %s86, %s87
    %p101 = scmp.eq.s32.totalorder %s15, 1
    %p102 = por %p100, %p101
    %p104 = scmp.ne.s32.totalorder %s87, %s103
    %p105 = scmp.eq.s32.totalorder %s15, 0
    %p106 = por %p104, %p105
    %s107 = ssub.s32 %s16, %s28
    %s108 = ssub.s32 %s17, %s24
    %s109 = sor.u32 %s107, %s108
    %p110 = scmp.eq.s32.totalorder %s109, 0
    %s112 = sadd.s32 %s111, 1
    %s113 = scalar_select %p110, %s111, %s112
    %p116 = pneg %p110
    %p117 = scmp.eq.s32.totalorder %s9, 1
    %p118 = por %p116, %p117
    %p119 = scmp.ne.s32.totalorder %s111, %s114
    %p120 = scmp.eq.s32.totalorder %s9, 0
    %p121 = por %p119, %p120
    %p122 = scmp.ne.s32.totalorder %s111, %s114
    %p123 = scmp.eq.s32.totalorder %s14, 1
    %p124 = por %p122, %p123
    %p125 = scmp.ne.s32.totalorder %s114, %s115
    %p126 = scmp.eq.s32.totalorder %s14, 0
    %p127 = por %p125, %p126
    %p128 = scmp.ne.s32.totalorder %s114, %s115
    %p129 = scmp.eq.s32.totalorder %s15, 1
    %p130 = por %p128, %p129
    %p132 = scmp.ne.s32.totalorder %s115, %s131
    %p133 = scmp.eq.s32.totalorder %s15, 0
    %p134 = por %p132, %p133
    %p135 = scmp.le.s32.totalorder 1, %s9
    %p136 = scmp.lt.s32.totalorder %s9, 3
    %p137 = pnand %p135, %p136
    %p138 = pneg %p137
    // Predicated region
    $region9: #{a_call__.1} parent=5 // pred_check
      _
    $region10: #{a_call__.1} parent=5 // pred_check_branch
      %140 = sbr.rel (%p137) target = $region12
    $region11: #{a_call__.1} parent=5 // pred_region
      %s141 = ssub.s32 %s9, 1
      // Predicated region
      $region13: #{a_call__.1} parent=11 // pred_check
        %p142 = pneg %p73
      $region14: #{a_call__.1} parent=11 // pred_check_branch
        %144 = sbr.rel (%p142) target = $region16
      $region15: #{a_call__.1} parent=11 // pred_region
        %p145 = scmp.lt.s32.totalorder %s19, 0
        %s146 = scalar_select %p145, %s19, 0
        %s147 = smul.addr %s146, 4
        %s148 = scalar_lea.vmem %s1, %s147
      $region16: #{a_call__.1} parent=11 // pred_fallthru
        _
      // Predicated region
      $region17: #{a_call__.1} parent=11 // pred_check
        %p149 = pneg %p99
      $region18: #{a_call__.1} parent=11 // pred_check_branch
        %151 = sbr.rel (%p149) target = $region20
      $region19: #{a_call__.1} parent=11 // pred_region
        %p152 = scmp.lt.s32.totalorder %s19, 0
        %s153 = scalar_select %p152, %s19, 0
        %s154 = scalar_lea.vmem %s2, %s153
      $region20: #{a_call__.1} parent=11 // pred_fallthru
        _
    $region12: #{a_call__.1} parent=5 // pred_fallthru
      _
    %p155 = scmp.lt.s32.totalorder %s9, 2
    // Predicated region
    $region21: #{a_call__.1} parent=5 // pred_check
      %p156 = pneg %p155
    $region22: #{a_call__.1} parent=5 // pred_check_branch
      %158 = sbr.rel (%p156) target = $region24
    $region23: #{a_call__.1} parent=5 // pred_region
      // Predicated region
      $region25: #{a_call__.1} parent=23 // pred_check
        %p159 = pneg %p41
      $region26: #{a_call__.1} parent=23 // pred_check_branch
        %161 = sbr.rel (%p159) target = $region28
      $region27: #{a_call__.1} parent=23 // pred_region
        %s162 = smul.u32 16, %s16
        %p163 = scmp.lt.s32.totalorder %s162, 31
        %s164 = scalar_select %p163, %s162, 31
        %s165 = smul.addr %s164, 4
        %s166 = smul.addr %s165, 4
        %s167 = scalar_lea.vmem %s0, %s166
        %s168 = smul.u32 16, %s16
      $region28: #{a_call__.1} parent=23 // pred_fallthru
        _
    $region24: #{a_call__.1} parent=5 // pred_fallthru
      _
    %p169 = scmp.le.s32.totalorder 1, %s9
    %p170 = scmp.lt.s32.totalorder %s9, 3
    %p171 = pnand %p169, %p170
    %p172 = pneg %p171
    // Predicated region
    $region29: #{a_call__.1} parent=5 // pred_check
      _
    $region30: #{a_call__.1} parent=5 // pred_check_branch
      %174 = sbr.rel (%p171) target = $region32
    $region31: #{a_call__.1} parent=5 // pred_region
      %s175 = ssub.s32 %s9, 1
      %s176 = smul.u32 16, %s18
      %p177 = scmp.lt.s32.totalorder %s176, 31
      %s178 = scalar_select %p177, %s176, 31
      %s179 = smul.addr %s178, 4
      %s180 = smul.addr %s179, 4
      %s181 = scalar_lea.vmem %s0, %s180
      %p182 = pneg %p47
      %p183 = pneg %p44
      %p184 = scmp.lt.s32.totalorder %s19, 0
      %s185 = scalar_select %p184, %s19, 0
      %s186 = smul.addr %s185, 4
      %s187 = scalar_lea.vmem %s1, %s186
      %p188 = pneg %p73
      %p189 = pneg %p70
      %p190 = scmp.lt.s32.totalorder %s19, 0
      %s191 = scalar_select %p190, %s19, 0
      %s192 = scalar_lea.vmem %s2, %s191
      %p193 = pneg %p99
      %p194 = pneg %p96
      %p195 = pneg %p127
      %p196 = pneg %p124
      %s197 = smul.u32 16, %s18
      %p198 = scmp.lt.s32.totalorder %s197, 31
      %s199 = scalar_select %p198, %s197, 31
      %p200 = scmp.lt.s32.totalorder %s19, 0
      %s201 = scalar_select %p200, %s19, 0
      %s202 = sadd.s32 %s201, %s199
      %s203 = smul.addr %s202, 8
      %s204 = scalar_lea.vmem %s3, %s203
      %s205 = smul.u32 16, %s18
      %p206 = scmp.lt.s32.totalorder %s205, 31
      %s207 = scalar_select %p206, %s205, 31
      %s208 = smul.addr %s207, 4
      %s209 = smul.addr %s208, 4
      %s210 = scalar_lea.vmem %s0, %s209
      %s211 = smul.u32 16, %s18
      %p212 = scmp.lt.s32.totalorder %s19, 0
      %s213 = scalar_select %p212, %s19, 0
      %s214 = smul.addr %s213, 4
      %s215 = scalar_lea.vmem %s1, %s214
      %p216 = scmp.lt.s32.totalorder %s19, 0
      %s217 = scalar_select %p216, %s19, 0
      %s218 = scalar_lea.vmem %s2, %s217
      %s219 = smul.u32 16, %s18
      %p220 = scmp.lt.s32.totalorder %s219, 31
      %s221 = scalar_select %p220, %s219, 31
      %p222 = scmp.lt.s32.totalorder %s19, 0
      %s223 = scalar_select %p222, %s19, 0
      %s224 = sadd.s32 %s223, %s221
      %s225 = smul.addr %s224, 8
      %s226 = scalar_lea.vmem %s3, %s225
      %s227 = smul.u32 16, %s18
      %v229 = vld [vmem:[%s210] sm:$0xff]
      %v230 = vld [vmem:[%s210 + $0x8] sm:$0xff]
      %v231 = vld [vmem:[%s210 + $0x10] sm:$0xff]
      %v232 = vld [vmem:[%s210 + $0x18] sm:$0xff]
      %v233 = vld [vmem:[%s210 + $0x20] sm:$0xff]
      %v234 = vld [vmem:[%s210 + $0x28] sm:$0xff]
      %v235 = vld [vmem:[%s210 + $0x30] sm:$0xff]
      %v236 = vld [vmem:[%s210 + $0x38] sm:$0xff]
      %v237 = vld [vmem:[%s210 + $0x40] sm:$0xff]
      %v238 = vld [vmem:[%s210 + $0x48] sm:$0xff]
      %v239 = vld [vmem:[%s210 + $0x50] sm:$0xff]
      %v240 = vld [vmem:[%s210 + $0x58] sm:$0xff]
      %v241 = vld [vmem:[%s210 + $0x60] sm:$0xff]
      %v242 = vld [vmem:[%s210 + $0x68] sm:$0xff]
      %v243 = vld [vmem:[%s210 + $0x70] sm:$0xff]
      %v244 = vld [vmem:[%s210 + $0x78] sm:$0xff]
      %v245 = vld [vmem:[%s210 + $0x80] sm:$0xff]
      %v246 = vld [vmem:[%s210 + $0x88] sm:$0xff]
      %v247 = vld [vmem:[%s210 + $0x90] sm:$0xff]
      %v248 = vld [vmem:[%s210 + $0x98] sm:$0xff]
      %v249 = vld [vmem:[%s210 + $0xa0] sm:$0xff]
      %v250 = vld [vmem:[%s210 + $0xa8] sm:$0xff]
      %v251 = vld [vmem:[%s210 + $0xb0] sm:$0xff]
      %v252 = vld [vmem:[%s210 + $0xb8] sm:$0xff]
      %v253 = vld [vmem:[%s210 + $0xc0] sm:$0xff]
      %v254 = vld [vmem:[%s210 + $0xc8] sm:$0xff]
      %v255 = vld [vmem:[%s210 + $0xd0] sm:$0xff]
      %v256 = vld [vmem:[%s210 + $0xd8] sm:$0xff]
      %v257 = vld [vmem:[%s210 + $0xe0] sm:$0xff]
      %v258 = vld [vmem:[%s210 + $0xe8] sm:$0xff]
      %v259 = vld [vmem:[%s210 + $0xf0] sm:$0xff]
      %v260 = vld [vmem:[%s210 + $0xf8] sm:$0xff]
      %v261 = vld [vmem:[%s215] sm:$0xf]
      %v262 = vld [vmem:[%s215 + $0x4] sm:$0xf]
      %v263 = vld [vmem:[%s215 + $0x8] sm:$0xf]
      %v264 = vld [vmem:[%s215 + $0xc] sm:$0xf]
      %v265 = vld [vmem:[%s215 + $0x10] sm:$0xf]
      %v266 = vld [vmem:[%s215 + $0x14] sm:$0xf]
      %v267 = vld [vmem:[%s215 + $0x18] sm:$0xf]
      %v268 = vld [vmem:[%s215 + $0x1c] sm:$0xf]
      %v269 = vld [vmem:[%s215 + $0x20] sm:$0xf]
      %v270 = vld [vmem:[%s215 + $0x24] sm:$0xf]
      %v271 = vld [vmem:[%s215 + $0x28] sm:$0xf]
      %v272 = vld [vmem:[%s215 + $0x2c] sm:$0xf]
      %v273 = vld [vmem:[%s215 + $0x30] sm:$0xf]
      %v274 = vld [vmem:[%s215 + $0x34] sm:$0xf]
      %v275 = vld [vmem:[%s215 + $0x38] sm:$0xf]
      %v276 = vld [vmem:[%s215 + $0x3c] sm:$0xf]
      %v277 = vld [vmem:[%s215 + $0x40] sm:$0xf]
      %v278 = vld [vmem:[%s215 + $0x44] sm:$0xf]
      %v279 = vld [vmem:[%s215 + $0x48] sm:$0xf]
      %v280 = vld [vmem:[%s215 + $0x4c] sm:$0xf]
      %v281 = vld [vmem:[%s215 + $0x50] sm:$0xf]
      %v282 = vld [vmem:[%s215 + $0x54] sm:$0xf]
      %v283 = vld [vmem:[%s215 + $0x58] sm:$0xf]
      %v284 = vld [vmem:[%s215 + $0x5c] sm:$0xf]
      %v285 = vld [vmem:[%s215 + $0x60] sm:$0xf]
      %v286 = vld [vmem:[%s215 + $0x64] sm:$0xf]
      %v287 = vld [vmem:[%s215 + $0x68] sm:$0xf]
      %v288 = vld [vmem:[%s215 + $0x6c] sm:$0xf]
      %v289 = vld [vmem:[%s215 + $0x70] sm:$0xf]
      %v290 = vld [vmem:[%s215 + $0x74] sm:$0xf]
      %v291 = vld [vmem:[%s215 + $0x78] sm:$0xf]
      %v292 = vld [vmem:[%s215 + $0x7c] sm:$0xf]
      %v293 = vld [vmem:[%s215 + $0x80] sm:$0xf]
      %v294 = vld [vmem:[%s215 + $0x84] sm:$0xf]
      %v295 = vld [vmem:[%s215 + $0x88] sm:$0xf]
      %v296 = vld [vmem:[%s215 + $0x8c] sm:$0xf]
      %v297 = vld [vmem:[%s215 + $0x90] sm:$0xf]
      %v298 = vld [vmem:[%s215 + $0x94] sm:$0xf]
      %v299 = vld [vmem:[%s215 + $0x98] sm:$0xf]
      %v300 = vld [vmem:[%s215 + $0x9c] sm:$0xf]
      %v301 = vld [vmem:[%s215 + $0xa0] sm:$0xf]
      %v302 = vld [vmem:[%s215 + $0xa4] sm:$0xf]
      %v303 = vld [vmem:[%s215 + $0xa8] sm:$0xf]
      %v304 = vld [vmem:[%s215 + $0xac] sm:$0xf]
      %v305 = vld [vmem:[%s215 + $0xb0] sm:$0xf]
      %v306 = vld [vmem:[%s215 + $0xb4] sm:$0xf]
      %v307 = vld [vmem:[%s215 + $0xb8] sm:$0xf]
      %v308 = vld [vmem:[%s215 + $0xbc] sm:$0xf]
      %v309 = vld [vmem:[%s215 + $0xc0] sm:$0xf]
      %v310 = vld [vmem:[%s215 + $0xc4] sm:$0xf]
      %v311 = vld [vmem:[%s215 + $0xc8] sm:$0xf]
      %v312 = vld [vmem:[%s215 + $0xcc] sm:$0xf]
      %v313 = vld [vmem:[%s215 + $0xd0] sm:$0xf]
      %v314 = vld [vmem:[%s215 + $0xd4] sm:$0xf]
      %v315 = vld [vmem:[%s215 + $0xd8] sm:$0xf]
      %v316 = vld [vmem:[%s215 + $0xdc] sm:$0xf]
      %v317 = vld [vmem:[%s215 + $0xe0] sm:$0xf]
      %v318 = vld [vmem:[%s215 + $0xe4] sm:$0xf]
      %v319 = vld [vmem:[%s215 + $0xe8] sm:$0xf]
      %v320 = vld [vmem:[%s215 + $0xec] sm:$0xf]
      %v321 = vld [vmem:[%s215 + $0xf0] sm:$0xf]
      %v322 = vld [vmem:[%s215 + $0xf4] sm:$0xf]
      %v323 = vld [vmem:[%s215 + $0xf8] sm:$0xf]
      %v324 = vld [vmem:[%s215 + $0xfc] sm:$0xf]
      %v325 = vld [vmem:[%s218] sm:$0x1]
      %v327 = vlaneseq
      %v328 = vshrl.u32 %v327, 7
      %v329 = vsub.s32 0, %v328
      %v330 = vrot.slane %v325, %v329
      %v364 = vunpack.c.l.b16 %v229
      %v365 = vunpack.c.h.b16 %v229
      %v366 = vunpack.c.l.b16 %v230
      %v367 = vunpack.c.h.b16 %v230
      %v368 = vunpack.c.l.b16 %v231
      %v369 = vunpack.c.h.b16 %v231
      %v370 = vunpack.c.l.b16 %v232
      %v371 = vunpack.c.h.b16 %v232
      %v372 = vunpack.c.l.b16 %v233
      %v373 = vunpack.c.h.b16 %v233
      %v374 = vunpack.c.l.b16 %v234
      %v375 = vunpack.c.h.b16 %v234
      %v376 = vunpack.c.l.b16 %v235
      %v377 = vunpack.c.h.b16 %v235
      %v378 = vunpack.c.l.b16 %v236
      %v379 = vunpack.c.h.b16 %v236
      %v380 = vunpack.c.l.b16 %v237
      %v381 = vunpack.c.h.b16 %v237
      %v382 = vunpack.c.l.b16 %v238
      %v383 = vunpack.c.h.b16 %v238
      %v384 = vunpack.c.l.b16 %v239
      %v385 = vunpack.c.h.b16 %v239
      %v386 = vunpack.c.l.b16 %v240
      %v387 = vunpack.c.h.b16 %v240
      %v388 = vunpack.c.l.b16 %v241
      %v389 = vunpack.c.h.b16 %v241
      %v390 = vunpack.c.l.b16 %v242
      %v391 = vunpack.c.h.b16 %v242
      %v392 = vunpack.c.l.b16 %v243
      %v393 = vunpack.c.h.b16 %v243
      %v394 = vunpack.c.l.b16 %v244
      %v395 = vunpack.c.h.b16 %v244
      %v396 = vunpack.c.l.b16 %v245
      %v397 = vunpack.c.h.b16 %v245
      %v398 = vunpack.c.l.b16 %v246
      %v399 = vunpack.c.h.b16 %v246
      %v400 = vunpack.c.l.b16 %v247
      %v401 = vunpack.c.h.b16 %v247
      %v402 = vunpack.c.l.b16 %v248
      %v403 = vunpack.c.h.b16 %v248
      %v404 = vunpack.c.l.b16 %v249
      %v405 = vunpack.c.h.b16 %v249
      %v406 = vunpack.c.l.b16 %v250
      %v407 = vunpack.c.h.b16 %v250
      %v408 = vunpack.c.l.b16 %v251
      %v409 = vunpack.c.h.b16 %v251
      %v410 = vunpack.c.l.b16 %v252
      %v411 = vunpack.c.h.b16 %v252
      %v412 = vunpack.c.l.b16 %v253
      %v413 = vunpack.c.h.b16 %v253
      %v414 = vunpack.c.l.b16 %v254
      %v415 = vunpack.c.h.b16 %v254
      %v416 = vunpack.c.l.b16 %v255
      %v417 = vunpack.c.h.b16 %v255
      %v418 = vunpack.c.l.b16 %v256
      %v419 = vunpack.c.h.b16 %v256
      %v420 = vunpack.c.l.b16 %v257
      %v421 = vunpack.c.h.b16 %v257
      %v422 = vunpack.c.l.b16 %v258
      %v423 = vunpack.c.h.b16 %v258
      %v424 = vunpack.c.l.b16 %v259
      %v425 = vunpack.c.h.b16 %v259
      %v426 = vunpack.c.l.b16 %v260
      %v427 = vunpack.c.h.b16 %v260
      %v428 = vpack.c.b16 %v368, %v364
      %v429 = vpack.c.b16 %v369, %v365
      %v430 = vpack.c.b16 %v370, %v366
      %v431 = vpack.c.b16 %v371, %v367
      %v432 = vpack.c.b16 %v376, %v372
      %v433 = vpack.c.b16 %v377, %v373
      %v434 = vpack.c.b16 %v378, %v374
      %v435 = vpack.c.b16 %v379, %v375
      %v436 = vpack.c.b16 %v384, %v380
      %v437 = vpack.c.b16 %v385, %v381
      %v438 = vpack.c.b16 %v386, %v382
      %v439 = vpack.c.b16 %v387, %v383
      %v440 = vpack.c.b16 %v392, %v388
      %v441 = vpack.c.b16 %v393, %v389
      %v442 = vpack.c.b16 %v394, %v390
      %v443 = vpack.c.b16 %v395, %v391
      %v444 = vpack.c.b16 %v400, %v396
      %v445 = vpack.c.b16 %v401, %v397
      %v446 = vpack.c.b16 %v402, %v398
      %v447 = vpack.c.b16 %v403, %v399
      %v448 = vpack.c.b16 %v408, %v404
      %v449 = vpack.c.b16 %v409, %v405
      %v450 = vpack.c.b16 %v410, %v406
      %v451 = vpack.c.b16 %v411, %v407
      %v452 = vpack.c.b16 %v416, %v412
      %v453 = vpack.c.b16 %v417, %v413
      %v454 = vpack.c.b16 %v418, %v414
      %v455 = vpack.c.b16 %v419, %v415
      %v456 = vpack.c.b16 %v424, %v420
      %v457 = vpack.c.b16 %v425, %v421
      %v458 = vpack.c.b16 %v426, %v422
      %v459 = vpack.c.b16 %v427, %v423
      %v556 = vunpack.c.l.b16 %v261
      %v557 = vunpack.c.l.b16 %v262
      %v558 = vunpack.c.l.b16 %v263
      %v559 = vunpack.c.l.b16 %v264
      %v560 = vunpack.c.l.b16 %v265
      %v561 = vunpack.c.l.b16 %v266
      %v562 = vunpack.c.l.b16 %v267
      %v563 = vunpack.c.l.b16 %v268
      %v564 = vunpack.c.l.b16 %v269
      %v565 = vunpack.c.l.b16 %v270
      %v566 = vunpack.c.l.b16 %v271
      %v567 = vunpack.c.l.b16 %v272
      %v568 = vunpack.c.l.b16 %v273
      %v569 = vunpack.c.l.b16 %v274
      %v570 = vunpack.c.l.b16 %v275
      %v571 = vunpack.c.l.b16 %v276
      %v572 = vunpack.c.l.b16 %v277
      %v573 = vunpack.c.l.b16 %v278
      %v574 = vunpack.c.l.b16 %v279
      %v575 = vunpack.c.l.b16 %v280
      %v576 = vunpack.c.l.b16 %v281
      %v577 = vunpack.c.l.b16 %v282
      %v578 = vunpack.c.l.b16 %v283
      %v579 = vunpack.c.l.b16 %v284
      %v580 = vunpack.c.l.b16 %v285
      %v581 = vunpack.c.l.b16 %v286
      %v582 = vunpack.c.l.b16 %v287
      %v583 = vunpack.c.l.b16 %v288
      %v584 = vunpack.c.l.b16 %v289
      %v585 = vunpack.c.l.b16 %v290
      %v586 = vunpack.c.l.b16 %v291
      %v587 = vunpack.c.l.b16 %v292
      %v588 = vunpack.c.l.b16 %v293
      %v589 = vunpack.c.l.b16 %v294
      %v590 = vunpack.c.l.b16 %v295
      %v591 = vunpack.c.l.b16 %v296
      %v592 = vunpack.c.l.b16 %v297
      %v593 = vunpack.c.l.b16 %v298
      %v594 = vunpack.c.l.b16 %v299
      %v595 = vunpack.c.l.b16 %v300
      %v596 = vunpack.c.l.b16 %v301
      %v597 = vunpack.c.l.b16 %v302
      %v598 = vunpack.c.l.b16 %v303
      %v599 = vunpack.c.l.b16 %v304
      %v600 = vunpack.c.l.b16 %v305
      %v601 = vunpack.c.l.b16 %v306
      %v602 = vunpack.c.l.b16 %v307
      %v603 = vunpack.c.l.b16 %v308
      %v604 = vunpack.c.l.b16 %v309
      %v605 = vunpack.c.l.b16 %v310
      %v606 = vunpack.c.l.b16 %v311
      %v607 = vunpack.c.l.b16 %v312
      %v608 = vunpack.c.l.b16 %v313
      %v609 = vunpack.c.l.b16 %v314
      %v610 = vunpack.c.l.b16 %v315
      %v611 = vunpack.c.l.b16 %v316
      %v612 = vunpack.c.l.b16 %v317
      %v613 = vunpack.c.l.b16 %v318
      %v614 = vunpack.c.l.b16 %v319
      %v615 = vunpack.c.l.b16 %v320
      %v616 = vunpack.c.l.b16 %v321
      %v617 = vunpack.c.l.b16 %v322
      %v618 = vunpack.c.l.b16 %v323
      %v619 = vunpack.c.l.b16 %v324
      %v620 = vpack.c.b16 %v557, %v556
      %v621 = vpack.c.b16 %v559, %v558
      %v622 = vpack.c.b16 %v561, %v560
      %v623 = vpack.c.b16 %v563, %v562
      %v624 = vpack.c.b16 %v565, %v564
      %v625 = vpack.c.b16 %v567, %v566
      %v626 = vpack.c.b16 %v569, %v568
      %v627 = vpack.c.b16 %v571, %v570
      %v628 = vpack.c.b16 %v573, %v572
      %v629 = vpack.c.b16 %v575, %v574
      %v630 = vpack.c.b16 %v577, %v576
      %v631 = vpack.c.b16 %v579, %v578
      %v632 = vpack.c.b16 %v581, %v580
      %v633 = vpack.c.b16 %v583, %v582
      %v634 = vpack.c.b16 %v585, %v584
      %v635 = vpack.c.b16 %v587, %v586
      %v636 = vpack.c.b16 %v589, %v588
      %v637 = vpack.c.b16 %v591, %v590
      %v638 = vpack.c.b16 %v593, %v592
      %v639 = vpack.c.b16 %v595, %v594
      %v640 = vpack.c.b16 %v597, %v596
      %v641 = vpack.c.b16 %v599, %v598
      %v642 = vpack.c.b16 %v601, %v600
      %v643 = vpack.c.b16 %v603, %v602
      %v644 = vpack.c.b16 %v605, %v604
      %v645 = vpack.c.b16 %v607, %v606
      %v646 = vpack.c.b16 %v609, %v608
      %v647 = vpack.c.b16 %v611, %v610
      %v648 = vpack.c.b16 %v613, %v612
      %v649 = vpack.c.b16 %v615, %v614
      %v650 = vpack.c.b16 %v617, %v616
      %v651 = vpack.c.b16 %v619, %v618
      %684 = vmatprep.subr.bf16.mxu0 0
      %685 = vmatpush1.bf16.msra.mxu0 %v627
      %686 = vmatprep.subr.bf16.mxu0 0
      %687 = vmatpush1.bf16.msra.mxu0 %v626
      %688 = vmatprep.subr.bf16.mxu0 0
      %689 = vmatpush1.bf16.msra.mxu0 %v625
      %690 = vmatprep.subr.bf16.mxu0 0
      %691 = vmatpush1.bf16.msra.mxu0 %v624
      %692 = vmatprep.subr.bf16.mxu0 0
      %693 = vmatpush1.bf16.msra.mxu0 %v623
      %694 = vmatprep.subr.bf16.mxu0 0
      %695 = vmatpush1.bf16.msra.mxu0 %v622
      %696 = vmatprep.subr.bf16.mxu0 0
      %697 = vmatpush1.bf16.msra.mxu0 %v621
      %698 = vmatprep.subr.bf16.mxu0 0
      %699 = vmatpush1.bf16.msra.mxu0 %v620
      %700 = vmatprep.subr.bf16.mxu0 0
      %701 = vmatpush2.bf16.msra.mxu0 %v635
      %702 = vmatprep.subr.bf16.mxu0 0
      %703 = vmatpush2.bf16.msra.mxu0 %v634
      %704 = vmatprep.subr.bf16.mxu0 0
      %705 = vmatpush2.bf16.msra.mxu0 %v633
      %706 = vmatprep.subr.bf16.mxu0 0
      %707 = vmatpush2.bf16.msra.mxu0 %v632
      %708 = vmatprep.subr.bf16.mxu0 0
      %709 = vmatpush2.bf16.msra.mxu0 %v631
      %710 = vmatprep.subr.bf16.mxu0 0
      %711 = vmatpush2.bf16.msra.mxu0 %v630
      %712 = vmatprep.subr.bf16.mxu0 0
      %713 = vmatpush2.bf16.msra.mxu0 %v629
      %714 = vmatprep.subr.bf16.mxu0 0
      %715 = vmatpush2.bf16.msra.mxu0 %v628
      %716 = vmatprep.mubr.bf16.mxu0 %v429
      %717 = vmatmul.mubr.bf16.gmra.mxu0 %v428
      %v718 = vpop.f32.mrf.mxu0
      %v719 = vadd.f32 %v330, %v718
      %v720 = vpop.f32.mrf.mxu0
      %v721 = vpop.f32.mrf.mxu0
      %v722 = vadd.f32 %v330, %v721
      %v723 = vpop.f32.mrf.mxu0
      %724 = vmatprep.mubr.bf16.mxu0 %v433
      %725 = vmatmul.mubr.bf16.gmra.mxu0 %v432
      %v726 = vpop.f32.mrf.mxu0
      %v727 = vadd.f32 %v330, %v726
      %v728 = vpop.f32.mrf.mxu0
      %v729 = vpop.f32.mrf.mxu0
      %v730 = vadd.f32 %v330, %v729
      %v731 = vpop.f32.mrf.mxu0
      %732 = vmatprep.mubr.bf16.mxu0 %v437
      %733 = vmatmul.mubr.bf16.gmra.mxu0 %v436
      %v734 = vpop.f32.mrf.mxu0
      %v735 = vadd.f32 %v330, %v734
      %v736 = vpop.f32.mrf.mxu0
      %v737 = vpop.f32.mrf.mxu0
      %v738 = vadd.f32 %v330, %v737
      %v739 = vpop.f32.mrf.mxu0
      %740 = vmatprep.mubr.bf16.mxu0 %v441
      %741 = vmatmul.mubr.bf16.gmra.mxu0 %v440
      %v742 = vpop.f32.mrf.mxu0
      %v743 = vadd.f32 %v330, %v742
      %v744 = vpop.f32.mrf.mxu0
      %v745 = vpop.f32.mrf.mxu0
      %v746 = vadd.f32 %v330, %v745
      %v747 = vpop.f32.mrf.mxu0
      %748 = vmatprep.mubr.bf16.mxu0 %v445
      %749 = vmatmul.mubr.bf16.gmra.mxu0 %v444
      %v750 = vpop.f32.mrf.mxu0
      %v751 = vadd.f32 %v330, %v750
      %v752 = vpop.f32.mrf.mxu0
      %v753 = vpop.f32.mrf.mxu0
      %v754 = vadd.f32 %v330, %v753
      %v755 = vpop.f32.mrf.mxu0
      %756 = vmatprep.mubr.bf16.mxu0 %v449
      %757 = vmatmul.mubr.bf16.gmra.mxu0 %v448
      %v758 = vpop.f32.mrf.mxu0
      %v759 = vadd.f32 %v330, %v758
      %v760 = vpop.f32.mrf.mxu0
      %v761 = vpop.f32.mrf.mxu0
      %v762 = vadd.f32 %v330, %v761
      %v763 = vpop.f32.mrf.mxu0
      %764 = vmatprep.mubr.bf16.mxu0 %v453
      %765 = vmatmul.mubr.bf16.gmra.mxu0 %v452
      %v766 = vpop.f32.mrf.mxu0
      %v767 = vadd.f32 %v330, %v766
      %v768 = vpop.f32.mrf.mxu0
      %v769 = vpop.f32.mrf.mxu0
      %v770 = vadd.f32 %v330, %v769
      %v771 = vpop.f32.mrf.mxu0
      %772 = vmatprep.mubr.bf16.mxu0 %v457
      %773 = vmatmul.mubr.bf16.gmra.mxu0 %v456
      %v774 = vpop.f32.mrf.mxu0
      %v775 = vadd.f32 %v330, %v774
      %v776 = vpop.f32.mrf.mxu0
      %v777 = vpop.f32.mrf.mxu0
      %v778 = vadd.f32 %v330, %v777
      %v779 = vpop.f32.mrf.mxu0
      %780 = vdwg.mxu0
      %781 = vmatprep.subr.bf16.mxu0 0
      %782 = vmatpush1.bf16.msra.mxu0 %v643
      %783 = vmatprep.subr.bf16.mxu0 0
      %784 = vmatpush1.bf16.msra.mxu0 %v642
      %785 = vmatprep.subr.bf16.mxu0 0
      %786 = vmatpush1.bf16.msra.mxu0 %v641
      %787 = vmatprep.subr.bf16.mxu0 0
      %788 = vmatpush1.bf16.msra.mxu0 %v640
      %789 = vmatprep.subr.bf16.mxu0 0
      %790 = vmatpush1.bf16.msra.mxu0 %v639
      %791 = vmatprep.subr.bf16.mxu0 0
      %792 = vmatpush1.bf16.msra.mxu0 %v638
      %793 = vmatprep.subr.bf16.mxu0 0
      %794 = vmatpush1.bf16.msra.mxu0 %v637
      %795 = vmatprep.subr.bf16.mxu0 0
      %796 = vmatpush1.bf16.msra.mxu0 %v636
      %797 = vmatprep.subr.bf16.mxu0 0
      %798 = vmatpush2.bf16.msra.mxu0 %v651
      %799 = vmatprep.subr.bf16.mxu0 0
      %800 = vmatpush2.bf16.msra.mxu0 %v650
      %801 = vmatprep.subr.bf16.mxu0 0
      %802 = vmatpush2.bf16.msra.mxu0 %v649
      %803 = vmatprep.subr.bf16.mxu0 0
      %804 = vmatpush2.bf16.msra.mxu0 %v648
      %805 = vmatprep.subr.bf16.mxu0 0
      %806 = vmatpush2.bf16.msra.mxu0 %v647
      %807 = vmatprep.subr.bf16.mxu0 0
      %808 = vmatpush2.bf16.msra.mxu0 %v646
      %809 = vmatprep.subr.bf16.mxu0 0
      %810 = vmatpush2.bf16.msra.mxu0 %v645
      %811 = vmatprep.subr.bf16.mxu0 0
      %812 = vmatpush2.bf16.msra.mxu0 %v644
      %813 = vmatprep.mubr.bf16.mxu0 %v431
      %814 = vmatmul.mubr.bf16.gmra.mxu0 %v430
      %v815 = vpop.f32.mrf.mxu0
      %v816 = vadd.f32 %v719, %v815
      %v817 = vpop.f32.mrf.mxu0
      %v818 = vpop.f32.mrf.mxu0
      %v819 = vadd.f32 %v722, %v818
      %v820 = vpop.f32.mrf.mxu0
      %821 = vmatprep.mubr.bf16.mxu0 %v435
      %822 = vmatmul.mubr.bf16.gmra.mxu0 %v434
      %v823 = vpop.f32.mrf.mxu0
      %v824 = vadd.f32 %v727, %v823
      %v825 = vpop.f32.mrf.mxu0
      %v826 = vpop.f32.mrf.mxu0
      %v827 = vadd.f32 %v730, %v826
      %v828 = vpop.f32.mrf.mxu0
      %829 = vmatprep.mubr.bf16.mxu0 %v439
      %830 = vmatmul.mubr.bf16.gmra.mxu0 %v438
      %v831 = vpop.f32.mrf.mxu0
      %v832 = vadd.f32 %v735, %v831
      %v833 = vpop.f32.mrf.mxu0
      %v834 = vpop.f32.mrf.mxu0
      %v835 = vadd.f32 %v738, %v834
      %v836 = vpop.f32.mrf.mxu0
      %837 = vmatprep.mubr.bf16.mxu0 %v443
      %838 = vmatmul.mubr.bf16.gmra.mxu0 %v442
      %v839 = vpop.f32.mrf.mxu0
      %v840 = vadd.f32 %v743, %v839
      %v841 = vpop.f32.mrf.mxu0
      %v842 = vpop.f32.mrf.mxu0
      %v843 = vadd.f32 %v746, %v842
      %v844 = vpop.f32.mrf.mxu0
      %845 = vmatprep.mubr.bf16.mxu0 %v447
      %846 = vmatmul.mubr.bf16.gmra.mxu0 %v446
      %v847 = vpop.f32.mrf.mxu0
      %v848 = vadd.f32 %v751, %v847
      %v849 = vpop.f32.mrf.mxu0
      %v850 = vpop.f32.mrf.mxu0
      %v851 = vadd.f32 %v754, %v850
      %v852 = vpop.f32.mrf.mxu0
      %853 = vmatprep.mubr.bf16.mxu0 %v451
      %854 = vmatmul.mubr.bf16.gmra.mxu0 %v450
      %v855 = vpop.f32.mrf.mxu0
      %v856 = vadd.f32 %v759, %v855
      %v857 = vpop.f32.mrf.mxu0
      %v858 = vpop.f32.mrf.mxu0
      %v859 = vadd.f32 %v762, %v858
      %v860 = vpop.f32.mrf.mxu0
      %861 = vmatprep.mubr.bf16.mxu0 %v455
      %862 = vmatmul.mubr.bf16.gmra.mxu0 %v454
      %v863 = vpop.f32.mrf.mxu0
      %v864 = vadd.f32 %v767, %v863
      %v865 = vpop.f32.mrf.mxu0
      %v866 = vpop.f32.mrf.mxu0
      %v867 = vadd.f32 %v770, %v866
      %v868 = vpop.f32.mrf.mxu0
      %869 = vmatprep.mubr.bf16.mxu0 %v459
      %870 = vmatmul.mubr.bf16.gmra.mxu0 %v458
      %v871 = vpop.f32.mrf.mxu0
      %v872 = vadd.f32 %v775, %v871
      %v873 = vpop.f32.mrf.mxu0
      %v874 = vpop.f32.mrf.mxu0
      %v875 = vadd.f32 %v778, %v874
      %v876 = vpop.f32.mrf.mxu0
      %877 = vdwg.mxu0
      %vm878 = vcmask 261120
      %879 = vst.msk [vmem:[%s226] sm:$0xff] %vm878, %v816
      %880 = vst.msk [vmem:[%s226 + $0x8] sm:$0xff] %vm878, %v819
      %881 = vst.msk [vmem:[%s226 + $0x10] sm:$0xff] %vm878, %v824
      %882 = vst.msk [vmem:[%s226 + $0x18] sm:$0xff] %vm878, %v827
      %883 = vst.msk [vmem:[%s226 + $0x20] sm:$0xff] %vm878, %v832
      %884 = vst.msk [vmem:[%s226 + $0x28] sm:$0xff] %vm878, %v835
      %885 = vst.msk [vmem:[%s226 + $0x30] sm:$0xff] %vm878, %v840
      %886 = vst.msk [vmem:[%s226 + $0x38] sm:$0xff] %vm878, %v843
      %887 = vst.msk [vmem:[%s226 + $0x40] sm:$0xff] %vm878, %v848
      %888 = vst.msk [vmem:[%s226 + $0x48] sm:$0xff] %vm878, %v851
      %889 = vst.msk [vmem:[%s226 + $0x50] sm:$0xff] %vm878, %v856
      %890 = vst.msk [vmem:[%s226 + $0x58] sm:$0xff] %vm878, %v859
      %891 = vst.msk [vmem:[%s226 + $0x60] sm:$0xff] %vm878, %v864
      %892 = vst.msk [vmem:[%s226 + $0x68] sm:$0xff] %vm878, %v867
      %893 = vst.msk [vmem:[%s226 + $0x70] sm:$0xff] %vm878, %v872
      %894 = vst.msk [vmem:[%s226 + $0x78] sm:$0xff] %vm878, %v875
      %s895 = smul.u32 16, %s18
      %p896 = scmp.lt.s32.totalorder %s895, 31
      %s897 = scalar_select %p896, %s895, 31
      %p898 = scmp.lt.s32.totalorder %s19, 0
      %s899 = scalar_select %p898, %s19, 0
      %s900 = sadd.s32 %s899, %s897
      %s901 = smul.addr %s900, 8
      %s902 = scalar_lea.vmem %s3, %s901
      // Predicated region
      $region33: #{a_call__.1} parent=31 // pred_check
        %p903 = pneg %p124
      $region34: #{a_call__.1} parent=31 // pred_check_branch
        %905 = sbr.rel (%p903) target = $region36
      $region35: #{a_call__.1} parent=31 // pred_region
        %s906 = smul.u32 16, %s18
      $region36: #{a_call__.1} parent=31 // pred_fallthru
        _
    $region32: #{a_call__.1} parent=5 // pred_fallthru
      _
    %p907 = scmp.le.s32.totalorder 2, %s9
    // Predicated region
    $region37: #{a_call__.1} parent=5 // pred_check
      %p908 = pneg %p907
    $region38: #{a_call__.1} parent=5 // pred_check_branch
      %910 = sbr.rel (%p908) target = $region40
    $region39: #{a_call__.1} parent=5 // pred_region
      %s911 = ssub.s32 %s9, 2
      // Predicated region
      $region41: #{a_call__.1} parent=39 // pred_check
        %p912 = pneg %p130
      $region42: #{a_call__.1} parent=39 // pred_check_branch
        %914 = sbr.rel (%p912) target = $region44
      $region43: #{a_call__.1} parent=39 // pred_region
        %s915 = smul.u32 16, %s20
        %p916 = scmp.lt.s32.totalorder %s915, 31
        %s917 = scalar_select %p916, %s915, 31
        %p918 = scmp.lt.s32.totalorder %s21, 0
        %s919 = scalar_select %p918, %s21, 0
        %s920 = sadd.s32 %s919, %s917
        %s921 = smul.addr %s920, 8
        %s922 = scalar_lea.vmem %s3, %s921
      $region44: #{a_call__.1} parent=39 // pred_fallthru
        _
    $region40: #{a_call__.1} parent=5 // pred_fallthru
      _
  $region6: #{a_call__.1} parent=0 // loop_footer
    %s13 = sadd.s32 1, %s9
  $region7: #{a_call__.1} parent=0 // loop_footer_branch
    %8 = sbr.rel target = $region3
  $region8: #{a_call__.1} parent=0 // loop_exit
    _

</llo_original>
